<compile_context>
chip_gen: v7x
topology: tpu7x:2x2x1
jax: 0.10.0
libtpu: 0.0.40
codegen_flags: <defaults>
</compile_context>

<pallas_src>
import math
from functools import partial

import numpy as np
import jax
import jax.numpy as jnp
from jax.experimental import pallas as pl
from jax.experimental.pallas import tpu as pltpu

LN_EPS = 1e-5


def _layernorm_f32(x, w, b):
    # torch F.layer_norm over last dim, biased variance, eps=1e-5 (all f32).
    mu = jnp.mean(x, axis=-1, keepdims=True)
    var = jnp.mean(jnp.square(x - mu), axis=-1, keepdims=True)
    return (x - mu) * jax.lax.rsqrt(var + LN_EPS) * w + b


def _erf(x):
    # Abramowitz & Stegun 7.1.26 rational approximation (|err| <= 1.5e-7);
    # guarantees Mosaic lowering and matches torch's exact (erf) GELU to f32.
    a1, a2, a3, a4, a5 = 0.254829592, -0.284496736, 1.421413741, -1.453152027, 1.061405429
    p = 0.3275911
    sign = jnp.sign(x)
    ax = jnp.abs(x)
    t = 1.0 / (1.0 + p * ax)
    poly = ((((a5 * t + a4) * t + a3) * t + a2) * t + a1) * t
    return sign * (1.0 - poly * jnp.exp(-ax * ax))


def _gelu_exact(x):
    return 0.5 * x * (1.0 + _erf(x * (1.0 / math.sqrt(2.0))))


# --------------------------------------------------------------------------
# Kernel 1: fused LayerNorm(ln_1) + QKV projection, tiled over (batch, seq).
# One (ts, D) x (D, 3D) bf16 matmul per tile (MXU lane-dense, N = 3D).
# --------------------------------------------------------------------------
def _ln_qkv_kernel(x_ref, ln1_w_ref, ln1_b_ref, wqkv_ref,
                   q_ref, k_ref, v_ref, *, d):
    x = x_ref[0].astype(jnp.float32)                       # (ts, D)
    h = _layernorm_f32(x, ln1_w_ref[0], ln1_b_ref[0])      # f32
    qkv = jnp.dot(h.astype(jnp.bfloat16), wqkv_ref[...],
                  preferred_element_type=jnp.float32)      # (ts, 3D) f32 acc
    q_ref[0] = qkv[:, :d].astype(q_ref.dtype)
    k_ref[0] = qkv[:, d:2 * d].astype(k_ref.dtype)
    v_ref[0] = qkv[:, 2 * d:].astype(v_ref.dtype)


# --------------------------------------------------------------------------
# Kernel 2: flash attention (online softmax over kv tiles) + out-projection
#           + residual + LayerNorm(ln_2) + MLP + residual, per query tile.
# Grid = (B, q_tiles, kv_tiles); kv is the innermost "arbitrary" reduction.
# --------------------------------------------------------------------------
def _flash_mlp_kernel(
    x_ref, q_ref, k_ref, v_ref, mask_ref,
    wo_ref, ln2_w_ref, ln2_b_ref, fc_w_ref, fc_b_ref, proj_w_ref, proj_b_ref,
    o_ref, m_sc, l_sc, acc_sc, *, n_heads, head_dim,
):
    ki = pl.program_id(2)
    nk = pl.num_programs(2)
    scale = 1.0 / math.sqrt(head_dim)

    @pl.when(ki == 0)
    def _():
        m_sc[...] = jnp.full_like(m_sc, -jnp.inf)
        l_sc[...] = jnp.zeros_like(l_sc)
        acc_sc[...] = jnp.zeros_like(acc_sc)

    q = q_ref[0]                                   # (tq, D) bf16
    k = k_ref[0]                                   # (tk, D) bf16
    v = v_ref[0]                                   # (tk, D) bf16
    mask = mask_ref[0, 0].astype(jnp.float32)      # (tq, tk) additive mask
    # TODO(synk): for the real vision encoder the mask is block-diagonal over
    # chunks and could be generated in-kernel from iota to kill the mask DMA.

    for h in range(n_heads):
        lo = h * head_dim
        q_h = q[:, lo:lo + head_dim]               # activation slices, not weights
        k_h = k[:, lo:lo + head_dim]
        v_h = v[:, lo:lo + head_dim]
        # scores = (q_h @ k_h^T) * scale + mask, accumulated in f32
        s = jax.lax.dot_general(q_h, k_h, (((1,), (1,)), ((), ())),
                                preferred_element_type=jnp.float32)
        s = s * scale + mask
        m_prev = m_sc[h]                           # (tq, 1)
        m_new = jnp.maximum(m_prev, jnp.max(s, axis=-1, keepdims=True))
        alpha = jnp.exp(m_prev - m_new)
        p = jnp.exp(s - m_new)                     # f32
        l_sc[h] = alpha * l_sc[h] + jnp.sum(p, axis=-1, keepdims=True)
        acc_sc[h] = alpha * acc_sc[h] + jnp.dot(
            p.astype(jnp.bfloat16), v_h, preferred_element_type=jnp.float32)
        m_sc[h] = m_new

    @pl.when(ki == nk - 1)
    def _():
        # Normalize, concat heads -> single (tq, D) x (D, D) out-projection.
        heads = [acc_sc[h] * pl.reciprocal(l_sc[h], approx=True)
                 for h in range(n_heads)]
        attn = jnp.concatenate(heads, axis=-1)                     # (tq, D) f32
        attn_o = jnp.dot(attn.astype(jnp.bfloat16), wo_ref[...],
                         preferred_element_type=jnp.float32)
        # all-reduce identity (mp world size 1); qkvo_replication == 1; gate == 1
        x1 = x_ref[0].astype(jnp.float32) + attn_o                 # residual 1

        h2 = _layernorm_f32(x1, ln2_w_ref[0], ln2_b_ref[0])
        hid = jnp.dot(h2.astype(jnp.bfloat16), fc_w_ref[...],
                      preferred_element_type=jnp.float32) + fc_b_ref[0]
        hid = _gelu_exact(hid)
        mlp = jnp.dot(hid.astype(jnp.bfloat16), proj_w_ref[...],
                      preferred_element_type=jnp.float32) + proj_b_ref[0]
        o_ref[0] = (x1 + mlp).astype(o_ref.dtype)                  # residual 2


def image_transformer_block(x, mask, params, n_heads, *, tq=128, tk=128,
                            vmem_limit_bytes=48 * 1024 * 1024):
    B, S, D = x.shape
    head_dim = D // n_heads
    hidden = params["fc_w"].shape[1]

    tq = min(tq, S)
    tk = min(tk, S)
    assert S % tq == 0 and S % tk == 0, "S must be divisible by the tile sizes"
    assert tq % 8 == 0 or tq == S
    assert tk % 8 == 0 or tk == S

    bf16 = jnp.bfloat16
    # Fused QKV weight (D, 3D) and bf16 weights for all matmuls.
    wqkv = jnp.concatenate([params["wq"], params["wk"], params["wv"]],
                           axis=1).astype(bf16)
    wo = params["wo"].astype(bf16)
    fc_w = params["fc_w"].astype(bf16)
    proj_w = params["proj_w"].astype(bf16)
    ln1_w, ln1_b = params["ln1_w"], params["ln1_b"]
    ln2_w, ln2_b = params["ln2_w"], params["ln2_b"]
    fc_b, proj_b = params["fc_b"], params["proj_b"]

    cparams2d = pltpu.CompilerParams(
        dimension_semantics=("parallel", "parallel"),
        vmem_limit_bytes=vmem_limit_bytes)
    cparams3d = pltpu.CompilerParams(
        dimension_semantics=("parallel", "parallel", "arbitrary"),
        vmem_limit_bytes=vmem_limit_bytes)

    # ---- Kernel 1: LN1 + fused QKV projection (bf16 intermediates) ----
    q, k, v = pl.pallas_call(
        partial(_ln_qkv_kernel, d=D),
        grid=(B, S // tq),
        in_specs=[
            pl.BlockSpec((1, tq, D), lambda b, i: (b, i, 0)),   # x
            pl.BlockSpec((1, D), lambda b, i: (0, 0)),          # ln_1 w
            pl.BlockSpec((1, D), lambda b, i: (0, 0)),          # ln_1 b
            pl.BlockSpec((D, 3 * D), lambda b, i: (0, 0)),      # wqkv
        ],
        out_specs=[
            pl.BlockSpec((1, tq, D), lambda b, i: (b, i, 0)),
            pl.BlockSpec((1, tq, D), lambda b, i: (b, i, 0)),
            pl.BlockSpec((1, tq, D), lambda b, i: (b, i, 0)),
        ],
        out_shape=[
            jax.ShapeDtypeStruct((B, S, D), bf16),
            jax.ShapeDtypeStruct((B, S, D), bf16),
            jax.ShapeDtypeStruct((B, S, D), bf16),
        ],
        compiler_params=cparams2d,
    )(x, ln1_w, ln1_b, wqkv)

    # ---- Kernel 2: flash attention + out-proj + residual + MLP + residual ----
    kernel = partial(_flash_mlp_kernel, n_heads=n_heads, head_dim=head_dim)
    out = pl.pallas_call(
        kernel,
        grid=(B, S // tq, S // tk),
        in_specs=[
            pl.BlockSpec((1, tq, D), lambda b, qi, ki: (b, qi, 0)),        # x (residual)
            pl.BlockSpec((1, tq, D), lambda b, qi, ki: (b, qi, 0)),        # q tile
            pl.BlockSpec((1, tk, D), lambda b, qi, ki: (b, ki, 0)),        # k tile
            pl.BlockSpec((1, tk, D), lambda b, qi, ki: (b, ki, 0)),        # v tile
            pl.BlockSpec((1, 1, tq, tk), lambda b, qi, ki: (b, 0, qi, ki)),  # mask tile
            pl.BlockSpec((D, D), lambda b, qi, ki: (0, 0)),                # wo
            pl.BlockSpec((1, D), lambda b, qi, ki: (0, 0)),                # ln_2 w
            pl.BlockSpec((1, D), lambda b, qi, ki: (0, 0)),                # ln_2 b
            pl.BlockSpec((D, hidden), lambda b, qi, ki: (0, 0)),           # c_fc w
            pl.BlockSpec((1, hidden), lambda b, qi, ki: (0, 0)),           # c_fc b
            pl.BlockSpec((hidden, D), lambda b, qi, ki: (0, 0)),           # c_proj w
            pl.BlockSpec((1, D), lambda b, qi, ki: (0, 0)),                # c_proj b
        ],
        out_specs=pl.BlockSpec((1, tq, D), lambda b, qi, ki: (b, qi, 0)),
        out_shape=jax.ShapeDtypeStruct((B, S, D), x.dtype),
        scratch_shapes=[
            pltpu.VMEM((n_heads, tq, 1), jnp.float32),          # running max
            pltpu.VMEM((n_heads, tq, 1), jnp.float32),          # running sum
            pltpu.VMEM((n_heads, tq, head_dim), jnp.float32),   # output accumulator
        ],
        compiler_params=cparams3d,
    )(x, q, k, v, mask,
      wo, ln2_w, ln2_b, fc_w, fc_b, proj_w, proj_b)
    return out


def reference_block(x, mask, p, n_heads):
    """Pure-JAX f32 reference mirroring the PyTorch forward exactly."""
    B, S, D = x.shape
    hd = D // n_heads

    def ln(v, w, b):
        mu = v.mean(-1, keepdims=True)
        var = ((v - mu) ** 2).mean(-1, keepdims=True)
        return (v - mu) / jnp.sqrt(var + LN_EPS) * w + b

    h = ln(x, p["ln1_w"][0], p["ln1_b"][0])
    q = (h @ p["wq"]).reshape(B, S, n_heads, hd).transpose(0, 2, 1, 3)
    k = (h @ p["wk"]).reshape(B, S, n_heads, hd).transpose(0, 2, 1, 3)
    v = (h @ p["wv"]).reshape(B, S, n_heads, hd).transpose(0, 2, 1, 3)
    scores = jnp.einsum("bhqd,bhkd->bhqk", q, k) / math.sqrt(hd) + mask
    a = jax.nn.softmax(scores, axis=-1)
    o = jnp.einsum("bhqk,bhkd->bhqd", a, v).transpose(0, 2, 1, 3).reshape(B, S, D)
    x = x + o @ p["wo"]

    h2 = ln(x, p["ln2_w"][0], p["ln2_b"][0])
    hid = jax.nn.gelu(h2 @ p["fc_w"] + p["fc_b"][0], approximate=False)
    return x + hid @ p["proj_w"] + p["proj_b"][0]


if __name__ == "__main__":
    # Small shapes consistent with the module's forward:
    # x: (bsz*num_concurrent_media, num_chunks*ntks, dim), mask: (B, 1, S, S).
    # Chosen so the flash/MLP tiling (tq=tk=128) and lane alignment are exercised.
    B, n_chunks, ntok = 2, 2, 128
    S = n_chunks * ntok          # 256
    D = 128
    n_heads = 4                  # head_dim = 32
    mlp_ratio = 4.0
    hidden = int(mlp_ratio * D)  # 512

    key = jax.random.PRNGKey(0)
    ks = jax.random.split(key, 10)

    params = {
        "ln1_w": jnp.ones((1, D), jnp.float32),
        "ln1_b": jnp.zeros((1, D), jnp.float32),
        "ln2_w": jnp.ones((1, D), jnp.float32),
        "ln2_b": jnp.zeros((1, D), jnp.float32),
        # pre-transposed to (in_features, out_features)
        "wq": 0.05 * jax.random.normal(ks[0], (D, D), jnp.float32),
        "wk": 0.05 * jax.random.normal(ks[1], (D, D), jnp.float32),
        "wv": 0.05 * jax.random.normal(ks[2], (D, D), jnp.float32),
        "wo": 0.05 * jax.random.normal(ks[3], (D, D), jnp.float32),
        "fc_w": 0.05 * jax.random.normal(ks[4], (D, hidden), jnp.float32),
        "fc_b": 0.05 * jax.random.normal(ks[5], (1, hidden), jnp.float32),
        "proj_w": 0.05 * jax.random.normal(ks[6], (hidden, D), jnp.float32),
        "proj_b": 0.05 * jax.random.normal(ks[7], (1, D), jnp.float32),
    }

    x = jax.random.normal(ks[8], (B, S, D), jnp.float32)

    # Additive float mask: block-diagonal over chunks (cross-chunk masking),
    # as built in the vision encoder.
    chunk = jnp.arange(S) // ntok
    same_chunk = chunk[:, None] == chunk[None, :]
    mask = jnp.where(same_chunk, 0.0, -1e9).astype(jnp.float32)
    mask = jnp.broadcast_to(mask, (B, 1, S, S))

    out = image_transformer_block(x, mask, params, n_heads)
    out = jax.block_until_ready(out)

    ref = reference_block(x, mask, params, n_heads)
    # Tolerance sized for bf16 MXU matmul inputs (f32 accumulation); LN/softmax/
    # residuals are kept in f32 inside the kernels.
    np.testing.assert_allclose(np.asarray(out), np.asarray(ref),
                               rtol=2e-2, atol=2e-2)

    print("KERNEL_OK")
</pallas_src>

<mosaic_0001>
module attributes {stable_mosaic.version = 11 : i64} {
  func.func @_ln_qkv_kernel(%arg0: i32, %arg1: i32, %arg2: memref<1x128x128xf32, #tpu.memory_space<vmem>>, %arg3: memref<1x128xf32, #tpu.memory_space<vmem>>, %arg4: memref<1x128xf32, #tpu.memory_space<vmem>>, %arg5: memref<128x384xbf16, #tpu.memory_space<vmem>>, %arg6: memref<1x128x128xbf16, #tpu.memory_space<vmem>>, %arg7: memref<1x128x128xbf16, #tpu.memory_space<vmem>>, %arg8: memref<1x128x128xbf16, #tpu.memory_space<vmem>>) attributes {dimension_semantics = [#tpu.dimension_semantics<parallel>, #tpu.dimension_semantics<parallel>], iteration_bounds = array<i64: 2, 2>, scalar_prefetch = 0 : i64, scratch_operands = 0 : i64, tpu.core_type = #tpu.core_type<tc>, window_params = [{transform_indices = @transform_0, window_bounds = array<i64: 1, 128, 128>}, {pipeline_mode = #tpu.pipeline_mode<synchronous>, transform_indices = @transform_1, window_bounds = array<i64: 1, 128>}, {pipeline_mode = #tpu.pipeline_mode<synchronous>, transform_indices = @transform_2, window_bounds = array<i64: 1, 128>}, {pipeline_mode = #tpu.pipeline_mode<synchronous>, transform_indices = @transform_3, window_bounds = array<i64: 128, 384>}, {transform_indices = @transform_4, window_bounds = array<i64: 1, 128, 128>}, {transform_indices = @transform_5, window_bounds = array<i64: 1, 128, 128>}, {transform_indices = @transform_6, window_bounds = array<i64: 1, 128, 128>}]} {
    %c0 = arith.constant 0 : index
    %c0_0 = arith.constant 0 : index
    %c0_1 = arith.constant 0 : index
    %0 = vector.load %arg2[%c0, %c0_0, %c0_1] : memref<1x128x128xf32, #tpu.memory_space<vmem>>, vector<1x128x128xf32>
    %1 = vector.shape_cast %0 : vector<1x128x128xf32> to vector<128x128xf32>
    %c0_2 = arith.constant 0 : index
    %c0_3 = arith.constant 0 : index
    %2 = vector.load %arg3[%c0_2, %c0_3] : memref<1x128xf32, #tpu.memory_space<vmem>>, vector<1x128xf32>
    %3 = vector.shape_cast %2 : vector<1x128xf32> to vector<128xf32>
    %c0_4 = arith.constant 0 : index
    %c0_5 = arith.constant 0 : index
    %4 = vector.load %arg4[%c0_4, %c0_5] : memref<1x128xf32, #tpu.memory_space<vmem>>, vector<1x128xf32>
    %5 = vector.shape_cast %4 : vector<1x128xf32> to vector<128xf32>
    %cst = arith.constant dense<0.000000e+00> : vector<128xf32>
    %6 = vector.multi_reduction <add>, %1, %cst [1] : vector<128x128xf32> to vector<128xf32>
    %7 = vector.shape_cast %6 : vector<128xf32> to vector<128x1xf32>
    %cst_6 = arith.constant 1.280000e+02 : f32
    %8 = vector.broadcast %cst_6 : f32 to vector<128x1xf32>
    %9 = arith.divf %7, %8 : vector<128x1xf32>
    %10 = vector.broadcast %9 : vector<128x1xf32> to vector<128x128xf32>
    %11 = arith.subf %1, %10 : vector<128x128xf32>
    %12 = arith.mulf %11, %11 : vector<128x128xf32>
    %cst_7 = arith.constant dense<0.000000e+00> : vector<128xf32>
    %13 = vector.multi_reduction <add>, %12, %cst_7 [1] : vector<128x128xf32> to vector<128xf32>
    %14 = vector.shape_cast %13 : vector<128xf32> to vector<128x1xf32>
    %cst_8 = arith.constant 1.280000e+02 : f32
    %15 = vector.broadcast %cst_8 : f32 to vector<128x1xf32>
    %16 = arith.divf %14, %15 : vector<128x1xf32>
    %17 = vector.broadcast %9 : vector<128x1xf32> to vector<128x128xf32>
    %18 = arith.subf %1, %17 : vector<128x128xf32>
    %cst_9 = arith.constant 9.99999974E-6 : f32
    %19 = vector.broadcast %cst_9 : f32 to vector<128x1xf32>
    %20 = arith.addf %16, %19 : vector<128x1xf32>
    %21 = math.rsqrt %20 : vector<128x1xf32>
    %22 = vector.broadcast %21 : vector<128x1xf32> to vector<128x128xf32>
    %23 = arith.mulf %18, %22 : vector<128x128xf32>
    %24 = vector.shape_cast %3 : vector<128xf32> to vector<1x128xf32>
    %25 = vector.broadcast %24 : vector<1x128xf32> to vector<128x128xf32>
    %26 = arith.mulf %23, %25 : vector<128x128xf32>
    %27 = vector.shape_cast %5 : vector<128xf32> to vector<1x128xf32>
    %28 = vector.broadcast %27 : vector<1x128xf32> to vector<128x128xf32>
    %29 = arith.addf %26, %28 : vector<128x128xf32>
    %30 = arith.truncf %29 : vector<128x128xf32> to vector<128x128xbf16>
    %c0_10 = arith.constant 0 : index
    %c0_11 = arith.constant 0 : index
    %31 = vector.load %arg5[%c0_10, %c0_11] : memref<128x384xbf16, #tpu.memory_space<vmem>>, vector<128x384xbf16>
    %cst_12 = arith.constant dense<0.000000e+00> : vector<128x384xf32>
    %32 = tpu.matmul %30, %31, %cst_12 {dimension_numbers = #tpu.dot_dimension_numbers<[1], [0], [0], [1], [0, 0, 1, 1], [], []>} : vector<128x128xbf16>, vector<128x384xbf16>, vector<128x384xf32> -> vector<128x384xf32>
    %33 = vector.extract_strided_slice %32 {offsets = [0, 0], sizes = [128, 128], strides = [1, 1]} : vector<128x384xf32> to vector<128x128xf32>
    %34 = arith.truncf %33 : vector<128x128xf32> to vector<128x128xbf16>
    %c0_13 = arith.constant 0 : index
    %c0_14 = arith.constant 0 : index
    %c0_15 = arith.constant 0 : index
    %35 = vector.load %arg6[%c0_13, %c0_14, %c0_15] : memref<1x128x128xbf16, #tpu.memory_space<vmem>>, vector<1x128x128xbf16>
    %36 = vector.shape_cast %35 : vector<1x128x128xbf16> to vector<128x128xbf16>
    %37 = vector.shape_cast %34 : vector<128x128xbf16> to vector<1x128x128xbf16>
    tpu.vector_store %arg6[%c0_13, %c0_14, %c0_15], %37 {strides = array<i32>} : memref<1x128x128xbf16, #tpu.memory_space<vmem>>, vector<1x128x128xbf16>,
    %38 = vector.extract_strided_slice %32 {offsets = [0, 128], sizes = [128, 128], strides = [1, 1]} : vector<128x384xf32> to vector<128x128xf32>
    %39 = arith.truncf %38 : vector<128x128xf32> to vector<128x128xbf16>
    %c0_16 = arith.constant 0 : index
    %c0_17 = arith.constant 0 : index
    %c0_18 = arith.constant 0 : index
    %40 = vector.load %arg7[%c0_16, %c0_17, %c0_18] : memref<1x128x128xbf16, #tpu.memory_space<vmem>>, vector<1x128x128xbf16>
    %41 = vector.shape_cast %40 : vector<1x128x128xbf16> to vector<128x128xbf16>
    %42 = vector.shape_cast %39 : vector<128x128xbf16> to vector<1x128x128xbf16>
    tpu.vector_store %arg7[%c0_16, %c0_17, %c0_18], %42 {strides = array<i32>} : memref<1x128x128xbf16, #tpu.memory_space<vmem>>, vector<1x128x128xbf16>,
    %43 = vector.extract_strided_slice %32 {offsets = [0, 256], sizes = [128, 128], strides = [1, 1]} : vector<128x384xf32> to vector<128x128xf32>
    %44 = arith.truncf %43 : vector<128x128xf32> to vector<128x128xbf16>
    %c0_19 = arith.constant 0 : index
    %c0_20 = arith.constant 0 : index
    %c0_21 = arith.constant 0 : index
    %45 = vector.load %arg8[%c0_19, %c0_20, %c0_21] : memref<1x128x128xbf16, #tpu.memory_space<vmem>>, vector<1x128x128xbf16>
    %46 = vector.shape_cast %45 : vector<1x128x128xbf16> to vector<128x128xbf16>
    %47 = vector.shape_cast %44 : vector<128x128xbf16> to vector<1x128x128xbf16>
    tpu.vector_store %arg8[%c0_19, %c0_20, %c0_21], %47 {strides = array<i32>} : memref<1x128x128xbf16, #tpu.memory_space<vmem>>, vector<1x128x128xbf16>,
    return
  }
  func.func @transform_0(%arg0: i32, %arg1: i32) -> (i32, i32, i32) {
    %c0_i32 = arith.constant 0 : i32
    %c0_i32_0 = arith.constant 0 : i32
    return %arg0, %arg1, %c0_i32 : i32, i32, i32
  }
  func.func @transform_1(%arg0: i32, %arg1: i32) -> (i32, i32) {
    %c0_i32 = arith.constant 0 : i32
    %c0_i32_0 = arith.constant 0 : i32
    %c0_i32_1 = arith.constant 0 : i32
    return %c0_i32, %c0_i32_0 : i32, i32
  }
  func.func @transform_2(%arg0: i32, %arg1: i32) -> (i32, i32) {
    %c0_i32 = arith.constant 0 : i32
    %c0_i32_0 = arith.constant 0 : i32
    %c0_i32_1 = arith.constant 0 : i32
    return %c0_i32, %c0_i32_0 : i32, i32
  }
  func.func @transform_3(%arg0: i32, %arg1: i32) -> (i32, i32) {
    %c0_i32 = arith.constant 0 : i32
    %c0_i32_0 = arith.constant 0 : i32
    %c0_i32_1 = arith.constant 0 : i32
    return %c0_i32, %c0_i32_0 : i32, i32
  }
  func.func @transform_4(%arg0: i32, %arg1: i32) -> (i32, i32, i32) {
    %c0_i32 = arith.constant 0 : i32
    %c0_i32_0 = arith.constant 0 : i32
    return %arg0, %arg1, %c0_i32 : i32, i32, i32
  }
  func.func @transform_5(%arg0: i32, %arg1: i32) -> (i32, i32, i32) {
    %c0_i32 = arith.constant 0 : i32
    %c0_i32_0 = arith.constant 0 : i32
    return %arg0, %arg1, %c0_i32 : i32, i32, i32
  }
  func.func @transform_6(%arg0: i32, %arg1: i32) -> (i32, i32, i32) {
    %c0_i32 = arith.constant 0 : i32
    %c0_i32_0 = arith.constant 0 : i32
    return %arg0, %arg1, %c0_i32 : i32, i32, i32
  }
}

</mosaic_0001>

<llo_original>
// kernel: tpu_custom_call.1
$region0: #{tpu_custom_call.1}
  #allocation0 [shape = 'u32[]', space=smem, size = 0x4, offset = 0x4, fixed_abs, tag = 'smem constant byte address 0x4 - core index']
  #allocation1 [shape = 'u32[144,128]{1,0:T(1,128)}', space=vmem, size = 0x12000, scoped, tag = 'internal scratch']
  %s0 = inlined_call_operand.hbm [shape: f32[2,256,128], index: 0, kind: input, shape index: {}]
  %s1 = inlined_call_operand.vmem [shape: f32[1,128], index: 1, kind: input, shape index: {}]
  %s2 = inlined_call_operand.vmem [shape: f32[1,128], index: 2, kind: input, shape index: {}]
  %s3 = inlined_call_operand.hbm [shape: bf16[128,384], index: 3, kind: input, shape index: {}]
  %s4 = inlined_call_operand.hbm [shape: bf16[2,256,128], index: 4, kind: output, shape index: {0}]
  %s5 = inlined_call_operand.hbm [shape: bf16[2,256,128], index: 5, kind: output, shape index: {1}]
  %s6 = inlined_call_operand.hbm [shape: bf16[2,256,128], index: 6, kind: output, shape index: {2}]
  %7 = xla_tuple %s4, %s5, %s6
  %s8 = sld [smem:[#allocation0]]
  $region73: #{tpu_custom_call.1} parent=0
    _
  %s10 = ssub.s32 1, %s8
  %s11 = scalar_select 0, %s10, %s8
  $region1: #{tpu_custom_call.1} parent=0
    #allocation2 [shape = 'u8[131072]{0}', space=vmem, size = 0x20000, scoped, tag = 'input window, operand 0']
    #allocation3 [shape = 's32[2]{0}', space=sflag, size = 0x8, scoped, tag = 'scoped memory for tpu_custom_call.1']
    #allocation4 [shape = 's32[2]{0}', space=sflag, size = 0x8, scoped, tag = 'scoped memory for tpu_custom_call.1']
    #allocation5 [shape = 'u8[98304]{0}', space=vmem, size = 0x18000, scoped, tag = 'input window, operand 3, single buffered']
    #allocation6 [shape = 's32[1]{0}', space=sflag, size = 0x4, scoped, tag = 'scoped memory for tpu_custom_call.1']
    #allocation7 [shape = 'u8[65536]{0}', space=vmem, size = 0x10000, scoped, tag = 'output window, operand 0']
    #allocation8 [shape = 'u8[65536]{0}', space=vmem, size = 0x10000, scoped, tag = 'output window, operand 1']
    #allocation9 [shape = 's32[2]{0}', space=sflag, size = 0x8, scoped, tag = 'scoped memory for tpu_custom_call.1']
    #allocation10 [shape = 'u8[65536]{0}', space=vmem, size = 0x10000, scoped, tag = 'output window, operand 2']
    %12 = vsyncpa [#allocation3], 0
    %s13 = scalar_lea.sflag [#allocation3], 1
    %14 = vsyncpa %s13, 0
    %15 = vsyncpa [#allocation6], 0
    %16 = vsyncpa [#allocation4], 0
    %s17 = scalar_lea.sflag [#allocation4], 1
    %18 = vsyncpa %s17, 0
    %19 = vsyncpa [#allocation9], 0
    %s20 = scalar_lea.sflag [#allocation9], 1
    %21 = vsyncpa %s20, 0
    loop: start=0, step=1, limit=6
    $region2: #{tpu_custom_call.1} parent=1 // loop_pre_header
      _
    $region3: #{tpu_custom_call.1} parent=1 // loop_header
      %s23 = sphi 0, %s27
      %p24 = scmp.ge.s32.totalorder %s23, 6
      %s30 = sphi 0, %s42
      %s31 = sphi 0, %s38
      %s32 = sphi 0, %s30
      %s33 = sphi 0, %s31
      %s34 = sphi 0, %s32
      %s35 = sphi 0, %s33
      %s47 = sphi 0, %s49
      %s50 = sphi 0, %s47
      %s51 = sphi 0, %s50
      %s67 = sphi 0, %s51
      %s71 = sphi 0, %s71
      %s73 = sphi 0, %s71
      %s74 = sphi 0, %s73
      %s88 = sphi 0, %s74
      %s92 = sphi 0, %s92
      %s94 = sphi 0, %s92
      %s95 = sphi 0, %s94
      %s109 = sphi 0, %s95
      %s113 = sphi 0, %s113
      %s115 = sphi 0, %s113
      %s116 = sphi 0, %s115
      %s130 = sphi 0, %s116
      %s138 = sphi 0, %s140
      %s141 = sphi 0, %s138
      %s142 = sphi 0, %s141
      %s158 = sphi 0, %s142
      %s166 = sphi 0, %s168
      %s169 = sphi 0, %s166
      %s170 = sphi 0, %s169
      %s186 = sphi 0, %s170
      %s194 = sphi 0, %s196
      %s197 = sphi 0, %s194
      %s198 = sphi 0, %s197
      %s214 = sphi 0, %s198
    $region4: #{tpu_custom_call.1} parent=1 // loop_header_branch
      %26 = sbr.rel (%p24) target = $region8
    $region5: #{tpu_custom_call.1} parent=1 // loop_body
      %s28 = ssub.s32 %s23, 1
      %s29 = ssub.s32 %s23, 2
      %s36 = sadd.s32 1, %s31
      %p37 = scmp.ge.s32.totalorder %s36, 2
      %s38 = scalar_select %p37, 0, %s36
      %s39 = sadd.s32 1, %s30
      %s40 = scalar_select %p37, %s39, %s30
      %p41 = scmp.ge.s32.totalorder %s40, 2
      %s42 = scalar_select %p41, 0, %s40
      %s43 = ssub.s32 %s30, %s42
      %s44 = ssub.s32 %s31, %s38
      %s45 = sor.u32 %s43, %s44
      %p46 = scmp.eq.s32.totalorder %s45, 0
      %s48 = sadd.s32 %s47, 1
      %s49 = scalar_select %p46, %s47, %s48
      %p52 = pneg %p46
      %p53 = scmp.eq.s32.totalorder %s23, 3
      %p54 = por %p52, %p53
      %p55 = scmp.ne.s32.totalorder %s47, %s50
      %p56 = scmp.eq.s32.totalorder %s23, 0
      %p57 = por %p55, %p56
      %p58 = scmp.ne.s32.totalorder %s47, %s50
      %p59 = scmp.eq.s32.totalorder %s28, 3
      %p60 = por %p58, %p59
      %p61 = scmp.ne.s32.totalorder %s50, %s51
      %p62 = scmp.eq.s32.totalorder %s28, 0
      %p63 = por %p61, %p62
      %p64 = scmp.ne.s32.totalorder %s50, %s51
      %p65 = scmp.eq.s32.totalorder %s29, 3
      %p66 = por %p64, %p65
      %p68 = scmp.ne.s32.totalorder %s51, %s67
      %p69 = scmp.eq.s32.totalorder %s29, 0
      %p70 = por %p68, %p69
      %s72 = sadd.s32 %s71, 1
      %p75 = scmp.eq.s32.totalorder %s23, 3
      %p76 = scmp.ne.s32.totalorder %s71, %s73
      %p77 = scmp.eq.s32.totalorder %s23, 0
      %p78 = por %p76, %p77
      %p79 = scmp.ne.s32.totalorder %s71, %s73
      %p80 = scmp.eq.s32.totalorder %s28, 3
      %p81 = por %p79, %p80
      %p82 = scmp.ne.s32.totalorder %s73, %s74
      %p83 = scmp.eq.s32.totalorder %s28, 0
      %p84 = por %p82, %p83
      %p85 = scmp.ne.s32.totalorder %s73, %s74
      %p86 = scmp.eq.s32.totalorder %s29, 3
      %p87 = por %p85, %p86
      %p89 = scmp.ne.s32.totalorder %s74, %s88
      %p90 = scmp.eq.s32.totalorder %s29, 0
      %p91 = por %p89, %p90
      %s93 = sadd.s32 %s92, 1
      %p96 = scmp.eq.s32.totalorder %s23, 3
      %p97 = scmp.ne.s32.totalorder %s92, %s94
      %p98 = scmp.eq.s32.totalorder %s23, 0
      %p99 = por %p97, %p98
      %p100 = scmp.ne.s32.totalorder %s92, %s94
      %p101 = scmp.eq.s32.totalorder %s28, 3
      %p102 = por %p100, %p101
      %p103 = scmp.ne.s32.totalorder %s94, %s95
      %p104 = scmp.eq.s32.totalorder %s28, 0
      %p105 = por %p103, %p104
      %p106 = scmp.ne.s32.totalorder %s94, %s95
      %p107 = scmp.eq.s32.totalorder %s29, 3
      %p108 = por %p106, %p107
      %p110 = scmp.ne.s32.totalorder %s95, %s109
      %p111 = scmp.eq.s32.totalorder %s29, 0
      %p112 = por %p110, %p111
      %s114 = sadd.s32 %s113, 1
      %p117 = scmp.eq.s32.totalorder %s23, 3
      %p118 = scmp.ne.s32.totalorder %s113, %s115
      %p119 = scmp.eq.s32.totalorder %s23, 0
      %p120 = por %p118, %p119
      %p121 = scmp.ne.s32.totalorder %s113, %s115
      %p122 = scmp.eq.s32.totalorder %s28, 3
      %p123 = por %p121, %p122
      %p124 = scmp.ne.s32.totalorder %s115, %s116
      %p125 = scmp.eq.s32.totalorder %s28, 0
      %p126 = por %p124, %p125
      %p127 = scmp.ne.s32.totalorder %s115, %s116
      %p128 = scmp.eq.s32.totalorder %s29, 3
      %p129 = por %p127, %p128
      %p131 = scmp.ne.s32.totalorder %s116, %s130
      %p132 = scmp.eq.s32.totalorder %s29, 0
      %p133 = por %p131, %p132
      %s134 = ssub.s32 %s30, %s42
      %s135 = ssub.s32 %s31, %s38
      %s136 = sor.u32 %s134, %s135
      %p137 = scmp.eq.s32.totalorder %s136, 0
      %s139 = sadd.s32 %s138, 1
      %s140 = scalar_select %p137, %s138, %s139
      %p143 = pneg %p137
      %p144 = scmp.eq.s32.totalorder %s23, 3
      %p145 = por %p143, %p144
      %p146 = scmp.ne.s32.totalorder %s138, %s141
      %p147 = scmp.eq.s32.totalorder %s23, 0
      %p148 = por %p146, %p147
      %p149 = scmp.ne.s32.totalorder %s138, %s141
      %p150 = scmp.eq.s32.totalorder %s28, 3
      %p151 = por %p149, %p150
      %p152 = scmp.ne.s32.totalorder %s141, %s142
      %p153 = scmp.eq.s32.totalorder %s28, 0
      %p154 = por %p152, %p153
      %p155 = scmp.ne.s32.totalorder %s141, %s142
      %p156 = scmp.eq.s32.totalorder %s29, 3
      %p157 = por %p155, %p156
      %p159 = scmp.ne.s32.totalorder %s142, %s158
      %p160 = scmp.eq.s32.totalorder %s29, 0
      %p161 = por %p159, %p160
      %s162 = ssub.s32 %s30, %s42
      %s163 = ssub.s32 %s31, %s38
      %s164 = sor.u32 %s162, %s163
      %p165 = scmp.eq.s32.totalorder %s164, 0
      %s167 = sadd.s32 %s166, 1
      %s168 = scalar_select %p165, %s166, %s167
      %p171 = pneg %p165
      %p172 = scmp.eq.s32.totalorder %s23, 3
      %p173 = por %p171, %p172
      %p174 = scmp.ne.s32.totalorder %s166, %s169
      %p175 = scmp.eq.s32.totalorder %s23, 0
      %p176 = por %p174, %p175
      %p177 = scmp.ne.s32.totalorder %s166, %s169
      %p178 = scmp.eq.s32.totalorder %s28, 3
      %p179 = por %p177, %p178
      %p180 = scmp.ne.s32.totalorder %s169, %s170
      %p181 = scmp.eq.s32.totalorder %s28, 0
      %p182 = por %p180, %p181
      %p183 = scmp.ne.s32.totalorder %s169, %s170
      %p184 = scmp.eq.s32.totalorder %s29, 3
      %p185 = por %p183, %p184
      %p187 = scmp.ne.s32.totalorder %s170, %s186
      %p188 = scmp.eq.s32.totalorder %s29, 0
      %p189 = por %p187, %p188
      %s190 = ssub.s32 %s30, %s42
      %s191 = ssub.s32 %s31, %s38
      %s192 = sor.u32 %s190, %s191
      %p193 = scmp.eq.s32.totalorder %s192, 0
      %s195 = sadd.s32 %s194, 1
      %s196 = scalar_select %p193, %s194, %s195
      %p199 = pneg %p193
      %p200 = scmp.eq.s32.totalorder %s23, 3
      %p201 = por %p199, %p200
      %p202 = scmp.ne.s32.totalorder %s194, %s197
      %p203 = scmp.eq.s32.totalorder %s23, 0
      %p204 = por %p202, %p203
      %p205 = scmp.ne.s32.totalorder %s194, %s197
      %p206 = scmp.eq.s32.totalorder %s28, 3
      %p207 = por %p205, %p206
      %p208 = scmp.ne.s32.totalorder %s197, %s198
      %p209 = scmp.eq.s32.totalorder %s28, 0
      %p210 = por %p208, %p209
      %p211 = scmp.ne.s32.totalorder %s197, %s198
      %p212 = scmp.eq.s32.totalorder %s29, 3
      %p213 = por %p211, %p212
      %p215 = scmp.ne.s32.totalorder %s198, %s214
      %p216 = scmp.eq.s32.totalorder %s29, 0
      %p217 = por %p215, %p216
      %p218 = scmp.le.s32.totalorder 1, %s23
      %p219 = scmp.lt.s32.totalorder %s23, 5
      %p220 = pnand %p218, %p219
      %p221 = pneg %p220
      // Predicated region
      $region9: #{tpu_custom_call.1} parent=5 // pred_check
        _
      $region10: #{tpu_custom_call.1} parent=5 // pred_check_branch
        %223 = sbr.rel (%p220) target = $region12
      $region11: #{tpu_custom_call.1} parent=5 // pred_region
        %s224 = ssub.s32 %s23, 1
        // Predicated region
        $region13: #{tpu_custom_call.1} parent=11 // pred_check
          %p225 = pneg %p84
        $region14: #{tpu_custom_call.1} parent=11 // pred_check_branch
          %227 = sbr.rel (%p225) target = $region16
        $region15: #{tpu_custom_call.1} parent=11 // pred_region
          _
        $region16: #{tpu_custom_call.1} parent=11 // pred_fallthru
          _
        // Predicated region
        $region17: #{tpu_custom_call.1} parent=11 // pred_check
          %p228 = pneg %p105
        $region18: #{tpu_custom_call.1} parent=11 // pred_check_branch
          %230 = sbr.rel (%p228) target = $region20
        $region19: #{tpu_custom_call.1} parent=11 // pred_region
          _
        $region20: #{tpu_custom_call.1} parent=11 // pred_fallthru
          _
        // Predicated region
        $region21: #{tpu_custom_call.1} parent=11 // pred_check
          %p231 = pneg %p126
        $region22: #{tpu_custom_call.1} parent=11 // pred_check_branch
          %233 = sbr.rel (%p231) target = $region24
        $region23: #{tpu_custom_call.1} parent=11 // pred_region
          %s235 = ssub.s32 3072, 3072
          %236 = vsyncadd [#allocation6], %s235
          %s237 = sshll.u32 [#allocation5], 4
          %s238 = int_to_ptr.vmem [resolvable:$true] %s237
          %243 = dma.hbm_to_vmem [thread:$0]  %s3, 3072, %s238, [#allocation6], 192, 192, 12
        $region24: #{tpu_custom_call.1} parent=11 // pred_fallthru
          _
      $region12: #{tpu_custom_call.1} parent=5 // pred_fallthru
        _
      %p244 = scmp.lt.s32.totalorder %s23, 4
      // Predicated region
      $region25: #{tpu_custom_call.1} parent=5 // pred_check
        %p245 = pneg %p244
      $region26: #{tpu_custom_call.1} parent=5 // pred_check_branch
        %247 = sbr.rel (%p245) target = $region28
      $region27: #{tpu_custom_call.1} parent=5 // pred_region
        // Predicated region
        $region29: #{tpu_custom_call.1} parent=27 // pred_check
          %p248 = pneg %p57
        $region30: #{tpu_custom_call.1} parent=27 // pred_check_branch
          %250 = sbr.rel (%p248) target = $region32
        $region31: #{tpu_custom_call.1} parent=27 // pred_region
          %s251 = sand.u32 %s47, 1
          %s252 = scalar_lea.sflag [#allocation3], %s251
          %s253 = sand.u32 %s47, 1
          %s254 = smul.addr %s253, 128
          %s255 = scalar_lea.vmem [#allocation2], %s254
          %s256 = smul.u32 16, %s31
          %s258 = ssub.s32 2048, 2048
          %259 = vsyncadd %s252, %s258
          %s260 = smul.addr %s30, 32
          %s261 = sadd.s32 %s256, %s260
          %s262 = smul.addr %s261, 128
          %s263 = scalar_lea.hbm %s0, %s262
          %s264 = sshll.u32 %s255, 4
          %s265 = int_to_ptr.vmem [resolvable:$true] %s264
          %270 = dma.hbm_to_vmem [thread:$0]  %s263, 2048, %s265, %s252, 128, 128, 8
        $region32: #{tpu_custom_call.1} parent=27 // pred_fallthru
          _
      $region28: #{tpu_custom_call.1} parent=5 // pred_fallthru
        _
      %p271 = scmp.le.s32.totalorder 1, %s23
      %p272 = scmp.lt.s32.totalorder %s23, 5
      %p273 = pnand %p271, %p272
      %p274 = pneg %p273
      // Predicated region
      $region33: #{tpu_custom_call.1} parent=5 // pred_check
        _
      $region34: #{tpu_custom_call.1} parent=5 // pred_check_branch
        %276 = sbr.rel (%p273) target = $region36
      $region35: #{tpu_custom_call.1} parent=5 // pred_region
        %s277 = ssub.s32 %s23, 1
        %s278 = sand.u32 %s50, 1
        %s279 = scalar_lea.sflag [#allocation3], %s278
        %s280 = sand.u32 %s50, 1
        %s281 = smul.addr %s280, 128
        %s282 = scalar_lea.vmem [#allocation2], %s281
        // Predicated region
        $region37: #{tpu_custom_call.1} parent=35 // pred_check
          %p283 = pneg %p63
        $region38: #{tpu_custom_call.1} parent=35 // pred_check_branch
          %285 = sbr.rel (%p283) target = $region40
        $region39: #{tpu_custom_call.1} parent=35 // pred_region
          %286 = dma.done %s279, 2048
        $region40: #{tpu_custom_call.1} parent=35 // pred_fallthru
          _
        // Predicated region
        $region41: #{tpu_custom_call.1} parent=35 // pred_check
          %p287 = pneg %p126
        $region42: #{tpu_custom_call.1} parent=35 // pred_check_branch
          %289 = sbr.rel (%p287) target = $region44
        $region43: #{tpu_custom_call.1} parent=35 // pred_region
          %290 = dma.done [#allocation6], 3072
        $region44: #{tpu_custom_call.1} parent=35 // pred_fallthru
          _
        %s291 = sand.u32 %s50, 1
        %s292 = scalar_lea.sflag [#allocation3], %s291
        %s293 = sand.u32 %s50, 1
        %s294 = smul.addr %s293, 128
        %s295 = scalar_lea.vmem [#allocation2], %s294
        %p296 = pneg %p63
        %p297 = pneg %p60
        %p298 = pneg %p84
        %p299 = pneg %p81
        %p300 = pneg %p105
        %p301 = pneg %p102
        %p302 = pneg %p126
        %p303 = pneg %p123
        %p304 = pneg %p154
        %p305 = pneg %p151
        %s306 = sand.u32 %s141, 1
        %s307 = scalar_lea.sflag [#allocation4], %s306
        %s308 = sand.u32 %s141, 1
        %s309 = smul.addr %s308, 64
        %s310 = scalar_lea.vmem [#allocation7], %s309
        %p311 = pneg %p182
        %p312 = pneg %p179
        %s313 = sand.u32 %s28, 1
        %s314 = scalar_lea.sflag [#allocation9], %s313
        %s315 = sand.u32 %s169, 1
        %s316 = smul.addr %s315, 64
        %s317 = scalar_lea.vmem [#allocation8], %s316
        %p318 = pneg %p210
        %p319 = pneg %p207
        %s320 = sand.u32 %s28, 1
        %s321 = scalar_lea.sflag [#allocation9], %s320
        %s322 = sand.u32 %s197, 1
        %s323 = smul.addr %s322, 64
        %s324 = scalar_lea.vmem [#allocation10], %s323
        %s325 = smul.u32 16, %s33
        %s326 = smul.u32 16, %s33
        %s327 = smul.u32 16, %s33
        %s328 = smul.u32 16, %s33
        %v330 = vld [vmem:[%s282] sm:$0xff]
        %v331 = vld [vmem:[%s282 + $0x8] sm:$0xff]
        %v332 = vld [vmem:[%s282 + $0x10] sm:$0xff]
        %v333 = vld [vmem:[%s282 + $0x18] sm:$0xff]
        %v334 = vld [vmem:[%s282 + $0x20] sm:$0xff]
        %v335 = vld [vmem:[%s282 + $0x28] sm:$0xff]
        %v336 = vld [vmem:[%s282 + $0x30] sm:$0xff]
        %v337 = vld [vmem:[%s282 + $0x38] sm:$0xff]
        %v338 = vld [vmem:[%s282 + $0x40] sm:$0xff]
        %v339 = vld [vmem:[%s282 + $0x48] sm:$0xff]
        %v340 = vld [vmem:[%s282 + $0x50] sm:$0xff]
        %v341 = vld [vmem:[%s282 + $0x58] sm:$0xff]
        %v342 = vld [vmem:[%s282 + $0x60] sm:$0xff]
        %v343 = vld [vmem:[%s282 + $0x68] sm:$0xff]
        %v344 = vld [vmem:[%s282 + $0x70] sm:$0xff]
        %v345 = vld [vmem:[%s282 + $0x78] sm:$0xff]
        %v346 = vld [vmem:[%s1] sm:$0x1]
        %v347 = vld [vmem:[%s2] sm:$0x1]
        %348 = vadd.xlane.f32.xlu0 %v330
        %v349 = vpop.xlane.xlu0 %348
        %350 = vadd.xlane.f32.xlu0 %v331
        %v351 = vpop.xlane.xlu0 %350
        %352 = vadd.xlane.f32.xlu0 %v332
        %v353 = vpop.xlane.xlu0 %352
        %354 = vadd.xlane.f32.xlu0 %v333
        %v355 = vpop.xlane.xlu0 %354
        %356 = vadd.xlane.f32.xlu0 %v334
        %v357 = vpop.xlane.xlu0 %356
        %358 = vadd.xlane.f32.xlu0 %v335
        %v359 = vpop.xlane.xlu0 %358
        %360 = vadd.xlane.f32.xlu0 %v336
        %v361 = vpop.xlane.xlu0 %360
        %362 = vadd.xlane.f32.xlu0 %v337
        %v363 = vpop.xlane.xlu0 %362
        %364 = vadd.xlane.f32.xlu0 %v338
        %v365 = vpop.xlane.xlu0 %364
        %366 = vadd.xlane.f32.xlu0 %v339
        %v367 = vpop.xlane.xlu0 %366
        %368 = vadd.xlane.f32.xlu0 %v340
        %v369 = vpop.xlane.xlu0 %368
        %370 = vadd.xlane.f32.xlu0 %v341
        %v371 = vpop.xlane.xlu0 %370
        %372 = vadd.xlane.f32.xlu0 %v342
        %v373 = vpop.xlane.xlu0 %372
        %374 = vadd.xlane.f32.xlu0 %v343
        %v375 = vpop.xlane.xlu0 %374
        %376 = vadd.xlane.f32.xlu0 %v344
        %v377 = vpop.xlane.xlu0 %376
        %378 = vadd.xlane.f32.xlu0 %v345
        %v379 = vpop.xlane.xlu0 %378
        %v380 = vrcp.pop 128.0
        %v381 = vmul.f32 %v349, %v380
        %v382 = vmul.f32 %v351, %v380
        %v383 = vmul.f32 %v353, %v380
        %v384 = vmul.f32 %v355, %v380
        %v385 = vmul.f32 %v357, %v380
        %v386 = vmul.f32 %v359, %v380
        %v387 = vmul.f32 %v361, %v380
        %v388 = vmul.f32 %v363, %v380
        %v389 = vmul.f32 %v365, %v380
        %v390 = vmul.f32 %v367, %v380
        %v391 = vmul.f32 %v369, %v380
        %v392 = vmul.f32 %v371, %v380
        %v393 = vmul.f32 %v373, %v380
        %v394 = vmul.f32 %v375, %v380
        %v395 = vmul.f32 %v377, %v380
        %v396 = vmul.f32 %v379, %v380
        %v397 = vsub.f32 %v330, %v381
        %v398 = vsub.f32 %v331, %v382
        %v399 = vsub.f32 %v332, %v383
        %v400 = vsub.f32 %v333, %v384
        %v401 = vsub.f32 %v334, %v385
        %v402 = vsub.f32 %v335, %v386
        %v403 = vsub.f32 %v336, %v387
        %v404 = vsub.f32 %v337, %v388
        %v405 = vsub.f32 %v338, %v389
        %v406 = vsub.f32 %v339, %v390
        %v407 = vsub.f32 %v340, %v391
        %v408 = vsub.f32 %v341, %v392
        %v409 = vsub.f32 %v342, %v393
        %v410 = vsub.f32 %v343, %v394
        %v411 = vsub.f32 %v344, %v395
        %v412 = vsub.f32 %v345, %v396
        %v413 = vmul.f32 %v397, %v397
        %v414 = vmul.f32 %v398, %v398
        %v415 = vmul.f32 %v399, %v399
        %v416 = vmul.f32 %v400, %v400
        %v417 = vmul.f32 %v401, %v401
        %v418 = vmul.f32 %v402, %v402
        %v419 = vmul.f32 %v403, %v403
        %v420 = vmul.f32 %v404, %v404
        %v421 = vmul.f32 %v405, %v405
        %v422 = vmul.f32 %v406, %v406
        %v423 = vmul.f32 %v407, %v407
        %v424 = vmul.f32 %v408, %v408
        %v425 = vmul.f32 %v409, %v409
        %v426 = vmul.f32 %v410, %v410
        %v427 = vmul.f32 %v411, %v411
        %v428 = vmul.f32 %v412, %v412
        %429 = vadd.xlane.f32.xlu0 %v413
        %v430 = vpop.xlane.xlu0 %429
        %431 = vadd.xlane.f32.xlu0 %v414
        %v432 = vpop.xlane.xlu0 %431
        %433 = vadd.xlane.f32.xlu0 %v415
        %v434 = vpop.xlane.xlu0 %433
        %435 = vadd.xlane.f32.xlu0 %v416
        %v436 = vpop.xlane.xlu0 %435
        %437 = vadd.xlane.f32.xlu0 %v417
        %v438 = vpop.xlane.xlu0 %437
        %439 = vadd.xlane.f32.xlu0 %v418
        %v440 = vpop.xlane.xlu0 %439
        %441 = vadd.xlane.f32.xlu0 %v419
        %v442 = vpop.xlane.xlu0 %441
        %443 = vadd.xlane.f32.xlu0 %v420
        %v444 = vpop.xlane.xlu0 %443
        %445 = vadd.xlane.f32.xlu0 %v421
        %v446 = vpop.xlane.xlu0 %445
        %447 = vadd.xlane.f32.xlu0 %v422
        %v448 = vpop.xlane.xlu0 %447
        %449 = vadd.xlane.f32.xlu0 %v423
        %v450 = vpop.xlane.xlu0 %449
        %451 = vadd.xlane.f32.xlu0 %v424
        %v452 = vpop.xlane.xlu0 %451
        %453 = vadd.xlane.f32.xlu0 %v425
        %v454 = vpop.xlane.xlu0 %453
        %455 = vadd.xlane.f32.xlu0 %v426
        %v456 = vpop.xlane.xlu0 %455
        %457 = vadd.xlane.f32.xlu0 %v427
        %v458 = vpop.xlane.xlu0 %457
        %459 = vadd.xlane.f32.xlu0 %v428
        %v460 = vpop.xlane.xlu0 %459
        %v461 = vmul.f32 %v430, %v380
        %v462 = vmul.f32 %v432, %v380
        %v463 = vmul.f32 %v434, %v380
        %v464 = vmul.f32 %v436, %v380
        %v465 = vmul.f32 %v438, %v380
        %v466 = vmul.f32 %v440, %v380
        %v467 = vmul.f32 %v442, %v380
        %v468 = vmul.f32 %v444, %v380
        %v469 = vmul.f32 %v446, %v380
        %v470 = vmul.f32 %v448, %v380
        %v471 = vmul.f32 %v450, %v380
        %v472 = vmul.f32 %v452, %v380
        %v473 = vmul.f32 %v454, %v380
        %v474 = vmul.f32 %v456, %v380
        %v475 = vmul.f32 %v458, %v380
        %v476 = vmul.f32 %v460, %v380
        %v477 = vadd.f32 %v461, 1e-05
        %v478 = vadd.f32 %v462, 1e-05
        %v479 = vadd.f32 %v463, 1e-05
        %v480 = vadd.f32 %v464, 1e-05
        %v481 = vadd.f32 %v465, 1e-05
        %v482 = vadd.f32 %v466, 1e-05
        %v483 = vadd.f32 %v467, 1e-05
        %v484 = vadd.f32 %v468, 1e-05
        %v485 = vadd.f32 %v469, 1e-05
        %v486 = vadd.f32 %v470, 1e-05
        %v487 = vadd.f32 %v471, 1e-05
        %v488 = vadd.f32 %v472, 1e-05
        %v489 = vadd.f32 %v473, 1e-05
        %v490 = vadd.f32 %v474, 1e-05
        %v491 = vadd.f32 %v475, 1e-05
        %v492 = vadd.f32 %v476, 1e-05
        %v493 = vrsqrt.pop %v477
        %v494 = vrsqrt.pop %v478
        %v495 = vrsqrt.pop %v479
        %v496 = vrsqrt.pop %v480
        %v497 = vrsqrt.pop %v481
        %v498 = vrsqrt.pop %v482
        %v499 = vrsqrt.pop %v483
        %v500 = vrsqrt.pop %v484
        %v501 = vrsqrt.pop %v485
        %v502 = vrsqrt.pop %v486
        %v503 = vrsqrt.pop %v487
        %v504 = vrsqrt.pop %v488
        %v505 = vrsqrt.pop %v489
        %v506 = vrsqrt.pop %v490
        %v507 = vrsqrt.pop %v491
        %v508 = vrsqrt.pop %v492
        %v509 = vmul.f32 %v397, %v493
        %v510 = vmul.f32 %v398, %v494
        %v511 = vmul.f32 %v399, %v495
        %v512 = vmul.f32 %v400, %v496
        %v513 = vmul.f32 %v401, %v497
        %v514 = vmul.f32 %v402, %v498
        %v515 = vmul.f32 %v403, %v499
        %v516 = vmul.f32 %v404, %v500
        %v517 = vmul.f32 %v405, %v501
        %v518 = vmul.f32 %v406, %v502
        %v519 = vmul.f32 %v407, %v503
        %v520 = vmul.f32 %v408, %v504
        %v521 = vmul.f32 %v409, %v505
        %v522 = vmul.f32 %v410, %v506
        %v523 = vmul.f32 %v411, %v507
        %v524 = vmul.f32 %v412, %v508
        %v526 = vlaneseq
        %v527 = vshrl.u32 %v526, 7
        %v528 = vsub.s32 0, %v527
        %v529 = vrot.slane %v346, %v528
        %v531 = vmul.f32 %v509, %v529
        %v532 = vmul.f32 %v510, %v529
        %v533 = vmul.f32 %v511, %v529
        %v534 = vmul.f32 %v512, %v529
        %v535 = vmul.f32 %v513, %v529
        %v536 = vmul.f32 %v514, %v529
        %v537 = vmul.f32 %v515, %v529
        %v538 = vmul.f32 %v516, %v529
        %v539 = vmul.f32 %v517, %v529
        %v540 = vmul.f32 %v518, %v529
        %v541 = vmul.f32 %v519, %v529
        %v542 = vmul.f32 %v520, %v529
        %v543 = vmul.f32 %v521, %v529
        %v544 = vmul.f32 %v522, %v529
        %v545 = vmul.f32 %v523, %v529
        %v546 = vmul.f32 %v524, %v529
        %v548 = vlaneseq
        %v549 = vshrl.u32 %v548, 7
        %v550 = vsub.s32 0, %v549
        %v551 = vrot.slane %v347, %v550
        %v553 = vadd.f32 %v531, %v551
        %v554 = vadd.f32 %v532, %v551
        %v555 = vadd.f32 %v533, %v551
        %v556 = vadd.f32 %v534, %v551
        %v557 = vadd.f32 %v535, %v551
        %v558 = vadd.f32 %v536, %v551
        %v559 = vadd.f32 %v537, %v551
        %v560 = vadd.f32 %v538, %v551
        %v561 = vadd.f32 %v539, %v551
        %v562 = vadd.f32 %v540, %v551
        %v563 = vadd.f32 %v541, %v551
        %v564 = vadd.f32 %v542, %v551
        %v565 = vadd.f32 %v543, %v551
        %v566 = vadd.f32 %v544, %v551
        %v567 = vadd.f32 %v545, %v551
        %v568 = vadd.f32 %v546, %v551
        %v569 = vpack.c.bf16 %v554, %v553
        %v570 = vpack.c.bf16 %v556, %v555
        %v571 = vpack.c.bf16 %v558, %v557
        %v572 = vpack.c.bf16 %v560, %v559
        %v573 = vpack.c.bf16 %v562, %v561
        %v574 = vpack.c.bf16 %v564, %v563
        %v575 = vpack.c.bf16 %v566, %v565
        %v576 = vpack.c.bf16 %v568, %v567
        %v577 = vld [vmem:[#allocation5] sm:$0xff]
        %v578 = vld [vmem:[#allocation5 + $0x8] sm:$0xf]
        %v579 = vld [vmem:[#allocation5 + $0xc] sm:$0xff]
        %v580 = vld [vmem:[#allocation5 + $0x14] sm:$0xf]
        %v581 = vld [vmem:[#allocation5 + $0x18] sm:$0xff]
        %v582 = vld [vmem:[#allocation5 + $0x20] sm:$0xf]
        %v583 = vld [vmem:[#allocation5 + $0x24] sm:$0xff]
        %v584 = vld [vmem:[#allocation5 + $0x2c] sm:$0xf]
        %v585 = vld [vmem:[#allocation5 + $0x30] sm:$0xff]
        %v586 = vld [vmem:[#allocation5 + $0x38] sm:$0xf]
        %v587 = vld [vmem:[#allocation5 + $0x3c] sm:$0xff]
        %v588 = vld [vmem:[#allocation5 + $0x44] sm:$0xf]
        %v589 = vld [vmem:[#allocation5 + $0x48] sm:$0xff]
        %v590 = vld [vmem:[#allocation5 + $0x50] sm:$0xf]
        %v591 = vld [vmem:[#allocation5 + $0x54] sm:$0xff]
        %v592 = vld [vmem:[#allocation5 + $0x5c] sm:$0xf]
        %v593 = vld [vmem:[#allocation5 + $0x60] sm:$0xff]
        %v594 = vld [vmem:[#allocation5 + $0x68] sm:$0xf]
        %v595 = vld [vmem:[#allocation5 + $0x6c] sm:$0xff]
        %v596 = vld [vmem:[#allocation5 + $0x74] sm:$0xf]
        %v597 = vld [vmem:[#allocation5 + $0x78] sm:$0xff]
        %v598 = vld [vmem:[#allocation5 + $0x80] sm:$0xf]
        %v599 = vld [vmem:[#allocation5 + $0x84] sm:$0xff]
        %v600 = vld [vmem:[#allocation5 + $0x8c] sm:$0xf]
        %v601 = vld [vmem:[#allocation5 + $0x90] sm:$0xff]
        %v602 = vld [vmem:[#allocation5 + $0x98] sm:$0xf]
        %v603 = vld [vmem:[#allocation5 + $0x9c] sm:$0xff]
        %v604 = vld [vmem:[#allocation5 + $0xa4] sm:$0xf]
        %v605 = vld [vmem:[#allocation5 + $0xa8] sm:$0xff]
        %v606 = vld [vmem:[#allocation5 + $0xb0] sm:$0xf]
        %v607 = vld [vmem:[#allocation5 + $0xb4] sm:$0xff]
        %v608 = vld [vmem:[#allocation5 + $0xbc] sm:$0xf]
        %v641 = vunpack.c.l.b16 %v577
        %v642 = vunpack.c.h.b16 %v577
        %v643 = vunpack.c.l.b16 %v578
        %v644 = vunpack.c.l.b16 %v579
        %v645 = vunpack.c.h.b16 %v579
        %v646 = vunpack.c.l.b16 %v580
        %v647 = vunpack.c.l.b16 %v581
        %v648 = vunpack.c.h.b16 %v581
        %v649 = vunpack.c.l.b16 %v582
        %v650 = vunpack.c.l.b16 %v583
        %v651 = vunpack.c.h.b16 %v583
        %v652 = vunpack.c.l.b16 %v584
        %v653 = vunpack.c.l.b16 %v585
        %v654 = vunpack.c.h.b16 %v585
        %v655 = vunpack.c.l.b16 %v586
        %v656 = vunpack.c.l.b16 %v587
        %v657 = vunpack.c.h.b16 %v587
        %v658 = vunpack.c.l.b16 %v588
        %v659 = vunpack.c.l.b16 %v589
        %v660 = vunpack.c.h.b16 %v589
        %v661 = vunpack.c.l.b16 %v590
        %v662 = vunpack.c.l.b16 %v591
        %v663 = vunpack.c.h.b16 %v591
        %v664 = vunpack.c.l.b16 %v592
        %v665 = vunpack.c.l.b16 %v593
        %v666 = vunpack.c.h.b16 %v593
        %v667 = vunpack.c.l.b16 %v594
        %v668 = vunpack.c.l.b16 %v595
        %v669 = vunpack.c.h.b16 %v595
        %v670 = vunpack.c.l.b16 %v596
        %v671 = vunpack.c.l.b16 %v597
        %v672 = vunpack.c.h.b16 %v597
        %v673 = vunpack.c.l.b16 %v598
        %v674 = vunpack.c.l.b16 %v599
        %v675 = vunpack.c.h.b16 %v599
        %v676 = vunpack.c.l.b16 %v600
        %v677 = vunpack.c.l.b16 %v601
        %v678 = vunpack.c.h.b16 %v601
        %v679 = vunpack.c.l.b16 %v602
        %v680 = vunpack.c.l.b16 %v603
        %v681 = vunpack.c.h.b16 %v603
        %v682 = vunpack.c.l.b16 %v604
        %v683 = vunpack.c.l.b16 %v605
        %v684 = vunpack.c.h.b16 %v605
        %v685 = vunpack.c.l.b16 %v606
        %v686 = vunpack.c.l.b16 %v607
        %v687 = vunpack.c.h.b16 %v607
        %v688 = vunpack.c.l.b16 %v608
        %v689 = vpack.c.b16 %v644, %v641
        %v690 = vpack.c.b16 %v645, %v642
        %v691 = vpack.c.b16 %v646, %v643
        %v692 = vpack.c.b16 %v650, %v647
        %v693 = vpack.c.b16 %v651, %v648
        %v694 = vpack.c.b16 %v652, %v649
        %v695 = vpack.c.b16 %v656, %v653
        %v696 = vpack.c.b16 %v657, %v654
        %v697 = vpack.c.b16 %v658, %v655
        %v698 = vpack.c.b16 %v662, %v659
        %v699 = vpack.c.b16 %v663, %v660
        %v700 = vpack.c.b16 %v664, %v661
        %v701 = vpack.c.b16 %v668, %v665
        %v702 = vpack.c.b16 %v669, %v666
        %v703 = vpack.c.b16 %v670, %v667
        %v704 = vpack.c.b16 %v674, %v671
        %v705 = vpack.c.b16 %v675, %v672
        %v706 = vpack.c.b16 %v676, %v673
        %v707 = vpack.c.b16 %v680, %v677
        %v708 = vpack.c.b16 %v681, %v678
        %v709 = vpack.c.b16 %v682, %v679
        %v710 = vpack.c.b16 %v686, %v683
        %v711 = vpack.c.b16 %v687, %v684
        %v712 = vpack.c.b16 %v688, %v685
        %737 = vmatprep.subr.bf16.mxu0 %v690
        %738 = vmatpush1.bf16.msra.mxu0 %v689
        %739 = vmatprep.subr.bf16.mxu0 %v693
        %740 = vmatpush1.bf16.msra.mxu0 %v692
        %741 = vmatprep.subr.bf16.mxu0 %v696
        %742 = vmatpush1.bf16.msra.mxu0 %v695
        %743 = vmatprep.subr.bf16.mxu0 %v699
        %744 = vmatpush1.bf16.msra.mxu0 %v698
        %745 = vmatprep.subr.bf16.mxu0 %v702
        %746 = vmatpush1.bf16.msra.mxu0 %v701
        %747 = vmatprep.subr.bf16.mxu0 %v705
        %748 = vmatpush1.bf16.msra.mxu0 %v704
        %749 = vmatprep.subr.bf16.mxu0 %v708
        %750 = vmatpush1.bf16.msra.mxu0 %v707
        %751 = vmatprep.subr.bf16.mxu0 %v711
        %752 = vmatpush1.bf16.msra.mxu0 %v710
        %753 = vmatprep.subr.bf16.mxu0 0
        %754 = vmatpush1.bf16.msra.mxu0 0
        %755 = vmatprep.subr.bf16.mxu0 0
        %756 = vmatpush1.bf16.msra.mxu0 0
        %757 = vmatprep.subr.bf16.mxu0 0
        %758 = vmatpush1.bf16.msra.mxu0 0
        %759 = vmatprep.subr.bf16.mxu0 0
        %760 = vmatpush1.bf16.msra.mxu0 0
        %761 = vmatprep.subr.bf16.mxu0 0
        %762 = vmatpush1.bf16.msra.mxu0 0
        %763 = vmatprep.subr.bf16.mxu0 0
        %764 = vmatpush1.bf16.msra.mxu0 0
        %765 = vmatprep.subr.bf16.mxu0 0
        %766 = vmatpush1.bf16.msra.mxu0 0
        %767 = vmatprep.subr.bf16.mxu0 0
        %768 = vmatpush1.bf16.msra.mxu0 0
        %769 = vmatprep.mubr.bf16.mxu0 0
        %770 = vmatmul.mubr.bf16.gmra.mrb[0].mxu0 %v569
        %v771 = vpop.f32.mrb[0].mxu0
        %v772 = vadd.f32 0.0, %v771
        %v773 = vpop.f32.mrb[0].mxu0
        %v774 = vadd.f32 0.0, %v773
        %v775 = vpop.f32.mrb[0].mxu0
        %v776 = vadd.f32 0.0, %v775
        %v777 = vpop.f32.mrb[0].mxu0
        %v778 = vadd.f32 0.0, %v777
        %779 = vmatprep.mubr.bf16.mxu0 0
        %780 = vmatmul.mubr.bf16.gmra.mrb[0].mxu0 %v570
        %v781 = vpop.f32.mrb[0].mxu0
        %v782 = vadd.f32 0.0, %v781
        %v783 = vpop.f32.mrb[0].mxu0
        %v784 = vadd.f32 0.0, %v783
        %v785 = vpop.f32.mrb[0].mxu0
        %v786 = vadd.f32 0.0, %v785
        %v787 = vpop.f32.mrb[0].mxu0
        %v788 = vadd.f32 0.0, %v787
        %789 = vmatprep.mubr.bf16.mxu0 0
        %790 = vmatmul.mubr.bf16.gmra.mrb[0].mxu0 %v571
        %v791 = vpop.f32.mrb[0].mxu0
        %v792 = vadd.f32 0.0, %v791
        %v793 = vpop.f32.mrb[0].mxu0
        %v794 = vadd.f32 0.0, %v793
        %v795 = vpop.f32.mrb[0].mxu0
        %v796 = vadd.f32 0.0, %v795
        %v797 = vpop.f32.mrb[0].mxu0
        %v798 = vadd.f32 0.0, %v797
        %799 = vmatprep.mubr.bf16.mxu0 0
        %800 = vmatmul.mubr.bf16.gmra.mrb[0].mxu0 %v572
        %v801 = vpop.f32.mrb[0].mxu0
        %v802 = vadd.f32 0.0, %v801
        %v803 = vpop.f32.mrb[0].mxu0
        %v804 = vadd.f32 0.0, %v803
        %v805 = vpop.f32.mrb[0].mxu0
        %v806 = vadd.f32 0.0, %v805
        %v807 = vpop.f32.mrb[0].mxu0
        %v808 = vadd.f32 0.0, %v807
        %809 = vmatprep.mubr.bf16.mxu0 0
        %810 = vmatmul.mubr.bf16.gmra.mrb[0].mxu0 %v573
        %v811 = vpop.f32.mrb[0].mxu0
        %v812 = vadd.f32 0.0, %v811
        %v813 = vpop.f32.mrb[0].mxu0
        %v814 = vadd.f32 0.0, %v813
        %v815 = vpop.f32.mrb[0].mxu0
        %v816 = vadd.f32 0.0, %v815
        %v817 = vpop.f32.mrb[0].mxu0
        %v818 = vadd.f32 0.0, %v817
        %819 = vmatprep.mubr.bf16.mxu0 0
        %820 = vmatmul.mubr.bf16.gmra.mrb[0].mxu0 %v574
        %v821 = vpop.f32.mrb[0].mxu0
        %v822 = vadd.f32 0.0, %v821
        %v823 = vpop.f32.mrb[0].mxu0
        %v824 = vadd.f32 0.0, %v823
        %v825 = vpop.f32.mrb[0].mxu0
        %v826 = vadd.f32 0.0, %v825
        %v827 = vpop.f32.mrb[0].mxu0
        %v828 = vadd.f32 0.0, %v827
        %829 = vmatprep.mubr.bf16.mxu0 0
        %830 = vmatmul.mubr.bf16.gmra.mrb[0].mxu0 %v575
        %v831 = vpop.f32.mrb[0].mxu0
        %v832 = vadd.f32 0.0, %v831
        %v833 = vpop.f32.mrb[0].mxu0
        %v834 = vadd.f32 0.0, %v833
        %v835 = vpop.f32.mrb[0].mxu0
        %v836 = vadd.f32 0.0, %v835
        %v837 = vpop.f32.mrb[0].mxu0
        %v838 = vadd.f32 0.0, %v837
        %839 = vmatprep.mubr.bf16.mxu0 0
        %840 = vmatmul.mubr.bf16.gmra.mrb[0].mxu0 %v576
        %v841 = vpop.f32.mrb[0].mxu0
        %v842 = vadd.f32 0.0, %v841
        %v843 = vpop.f32.mrb[0].mxu0
        %v844 = vadd.f32 0.0, %v843
        %v845 = vpop.f32.mrb[0].mxu0
        %v846 = vadd.f32 0.0, %v845
        %v847 = vpop.f32.mrb[0].mxu0
        %v848 = vadd.f32 0.0, %v847
        %849 = vdwg.mxu0
        %850 = vmatprep.subr.bf16.mxu0 0
        %851 = vmatpush1.bf16.msra.mxu0 %v691
        %852 = vmatprep.subr.bf16.mxu0 0
        %853 = vmatpush1.bf16.msra.mxu0 %v694
        %854 = vmatprep.subr.bf16.mxu0 0
        %855 = vmatpush1.bf16.msra.mxu0 %v697
        %856 = vmatprep.subr.bf16.mxu0 0
        %857 = vmatpush1.bf16.msra.mxu0 %v700
        %858 = vmatprep.subr.bf16.mxu0 0
        %859 = vmatpush1.bf16.msra.mxu0 %v703
        %860 = vmatprep.subr.bf16.mxu0 0
        %861 = vmatpush1.bf16.msra.mxu0 %v706
        %862 = vmatprep.subr.bf16.mxu0 0
        %863 = vmatpush1.bf16.msra.mxu0 %v709
        %864 = vmatprep.subr.bf16.mxu0 0
        %865 = vmatpush1.bf16.msra.mxu0 %v712
        %866 = vmatprep.subr.bf16.mxu0 0
        %867 = vmatpush1.bf16.msra.mxu0 0
        %868 = vmatprep.subr.bf16.mxu0 0
        %869 = vmatpush1.bf16.msra.mxu0 0
        %870 = vmatprep.subr.bf16.mxu0 0
        %871 = vmatpush1.bf16.msra.mxu0 0
        %872 = vmatprep.subr.bf16.mxu0 0
        %873 = vmatpush1.bf16.msra.mxu0 0
        %874 = vmatprep.subr.bf16.mxu0 0
        %875 = vmatpush1.bf16.msra.mxu0 0
        %876 = vmatprep.subr.bf16.mxu0 0
        %877 = vmatpush1.bf16.msra.mxu0 0
        %878 = vmatprep.subr.bf16.mxu0 0
        %879 = vmatpush1.bf16.msra.mxu0 0
        %880 = vmatprep.subr.bf16.mxu0 0
        %881 = vmatpush1.bf16.msra.mxu0 0
        %882 = vmatprep.mubr.bf16.mxu0 0
        %883 = vmatmul.mubr.bf16.gmra.mrb[0].mxu0 %v569
        %v884 = vpop.f32.mrb[0].mxu0
        %v885 = vadd.f32 0.0, %v884
        %v886 = vpop.f32.mrb[0].mxu0
        %v887 = vpop.f32.mrb[0].mxu0
        %v888 = vadd.f32 0.0, %v887
        %v889 = vpop.f32.mrb[0].mxu0
        %890 = vmatprep.mubr.bf16.mxu0 0
        %891 = vmatmul.mubr.bf16.gmra.mrb[0].mxu0 %v570
        %v892 = vpop.f32.mrb[0].mxu0
        %v893 = vadd.f32 0.0, %v892
        %v894 = vpop.f32.mrb[0].mxu0
        %v895 = vpop.f32.mrb[0].mxu0
        %v896 = vadd.f32 0.0, %v895
        %v897 = vpop.f32.mrb[0].mxu0
        %898 = vmatprep.mubr.bf16.mxu0 0
        %899 = vmatmul.mubr.bf16.gmra.mrb[0].mxu0 %v571
        %v900 = vpop.f32.mrb[0].mxu0
        %v901 = vadd.f32 0.0, %v900
        %v902 = vpop.f32.mrb[0].mxu0
        %v903 = vpop.f32.mrb[0].mxu0
        %v904 = vadd.f32 0.0, %v903
        %v905 = vpop.f32.mrb[0].mxu0
        %906 = vmatprep.mubr.bf16.mxu0 0
        %907 = vmatmul.mubr.bf16.gmra.mrb[0].mxu0 %v572
        %v908 = vpop.f32.mrb[0].mxu0
        %v909 = vadd.f32 0.0, %v908
        %v910 = vpop.f32.mrb[0].mxu0
        %v911 = vpop.f32.mrb[0].mxu0
        %v912 = vadd.f32 0.0, %v911
        %v913 = vpop.f32.mrb[0].mxu0
        %914 = vmatprep.mubr.bf16.mxu0 0
        %915 = vmatmul.mubr.bf16.gmra.mrb[0].mxu0 %v573
        %v916 = vpop.f32.mrb[0].mxu0
        %v917 = vadd.f32 0.0, %v916
        %v918 = vpop.f32.mrb[0].mxu0
        %v919 = vpop.f32.mrb[0].mxu0
        %v920 = vadd.f32 0.0, %v919
        %v921 = vpop.f32.mrb[0].mxu0
        %922 = vmatprep.mubr.bf16.mxu0 0
        %923 = vmatmul.mubr.bf16.gmra.mrb[0].mxu0 %v574
        %v924 = vpop.f32.mrb[0].mxu0
        %v925 = vadd.f32 0.0, %v924
        %v926 = vpop.f32.mrb[0].mxu0
        %v927 = vpop.f32.mrb[0].mxu0
        %v928 = vadd.f32 0.0, %v927
        %v929 = vpop.f32.mrb[0].mxu0
        %930 = vmatprep.mubr.bf16.mxu0 0
        %931 = vmatmul.mubr.bf16.gmra.mrb[0].mxu0 %v575
        %v932 = vpop.f32.mrb[0].mxu0
        %v933 = vadd.f32 0.0, %v932
        %v934 = vpop.f32.mrb[0].mxu0
        %v935 = vpop.f32.mrb[0].mxu0
        %v936 = vadd.f32 0.0, %v935
        %v937 = vpop.f32.mrb[0].mxu0
        %938 = vmatprep.mubr.bf16.mxu0 0
        %939 = vmatmul.mubr.bf16.gmra.mrb[0].mxu0 %v576
        %v940 = vpop.f32.mrb[0].mxu0
        %v941 = vadd.f32 0.0, %v940
        %v942 = vpop.f32.mrb[0].mxu0
        %v943 = vpop.f32.mrb[0].mxu0
        %v944 = vadd.f32 0.0, %v943
        %v945 = vpop.f32.mrb[0].mxu0
        %946 = vdwg.mxu0
        %v947 = vpack.c.bf16 %v776, %v772
        %v948 = vpack.c.bf16 %v786, %v782
        %v949 = vpack.c.bf16 %v796, %v792
        %v950 = vpack.c.bf16 %v806, %v802
        %v951 = vpack.c.bf16 %v816, %v812
        %v952 = vpack.c.bf16 %v826, %v822
        %v953 = vpack.c.bf16 %v836, %v832
        %v954 = vpack.c.bf16 %v846, %v842
        %v963 = vunpack.c.l.b16 %v947
        %v964 = vunpack.c.h.b16 %v947
        %v965 = vunpack.c.l.b16 %v948
        %v966 = vunpack.c.h.b16 %v948
        %v967 = vunpack.c.l.b16 %v949
        %v968 = vunpack.c.h.b16 %v949
        %v969 = vunpack.c.l.b16 %v950
        %v970 = vunpack.c.h.b16 %v950
        %v971 = vunpack.c.l.b16 %v951
        %v972 = vunpack.c.h.b16 %v951
        %v973 = vunpack.c.l.b16 %v952
        %v974 = vunpack.c.h.b16 %v952
        %v975 = vunpack.c.l.b16 %v953
        %v976 = vunpack.c.h.b16 %v953
        %v977 = vunpack.c.l.b16 %v954
        %v978 = vunpack.c.h.b16 %v954
        %v979 = vpack.c.b16 %v963, %v963
        %v980 = vpack.c.b16 %v964, %v964
        %v981 = vpack.c.b16 %v965, %v965
        %v982 = vpack.c.b16 %v966, %v966
        %v983 = vpack.c.b16 %v967, %v967
        %v984 = vpack.c.b16 %v968, %v968
        %v985 = vpack.c.b16 %v969, %v969
        %v986 = vpack.c.b16 %v970, %v970
        %v987 = vpack.c.b16 %v971, %v971
        %v988 = vpack.c.b16 %v972, %v972
        %v989 = vpack.c.b16 %v973, %v973
        %v990 = vpack.c.b16 %v974, %v974
        %v991 = vpack.c.b16 %v975, %v975
        %v992 = vpack.c.b16 %v976, %v976
        %v993 = vpack.c.b16 %v977, %v977
        %v994 = vpack.c.b16 %v978, %v978
        %1011 = vst [vmem:[%s310] sm:$0xf] %v979
        %1012 = vst [vmem:[%s310 + $0x4] sm:$0xf] %v980
        %1013 = vst [vmem:[%s310 + $0x8] sm:$0xf] %v981
        %1014 = vst [vmem:[%s310 + $0xc] sm:$0xf] %v982
        %1015 = vst [vmem:[%s310 + $0x10] sm:$0xf] %v983
        %1016 = vst [vmem:[%s310 + $0x14] sm:$0xf] %v984
        %1017 = vst [vmem:[%s310 + $0x18] sm:$0xf] %v985
        %1018 = vst [vmem:[%s310 + $0x1c] sm:$0xf] %v986
        %1019 = vst [vmem:[%s310 + $0x20] sm:$0xf] %v987
        %1020 = vst [vmem:[%s310 + $0x24] sm:$0xf] %v988
        %1021 = vst [vmem:[%s310 + $0x28] sm:$0xf] %v989
        %1022 = vst [vmem:[%s310 + $0x2c] sm:$0xf] %v990
        %1023 = vst [vmem:[%s310 + $0x30] sm:$0xf] %v991
        %1024 = vst [vmem:[%s310 + $0x34] sm:$0xf] %v992
        %1025 = vst [vmem:[%s310 + $0x38] sm:$0xf] %v993
        %1026 = vst [vmem:[%s310 + $0x3c] sm:$0xf] %v994
        %v1027 = vpack.c.bf16 %v778, %v774
        %v1028 = vpack.c.bf16 %v788, %v784
        %v1029 = vpack.c.bf16 %v798, %v794
        %v1030 = vpack.c.bf16 %v808, %v804
        %v1031 = vpack.c.bf16 %v818, %v814
        %v1032 = vpack.c.bf16 %v828, %v824
        %v1033 = vpack.c.bf16 %v838, %v834
        %v1034 = vpack.c.bf16 %v848, %v844
        %v1043 = vunpack.c.l.b16 %v1027
        %v1044 = vunpack.c.h.b16 %v1027
        %v1045 = vunpack.c.l.b16 %v1028
        %v1046 = vunpack.c.h.b16 %v1028
        %v1047 = vunpack.c.l.b16 %v1029
        %v1048 = vunpack.c.h.b16 %v1029
        %v1049 = vunpack.c.l.b16 %v1030
        %v1050 = vunpack.c.h.b16 %v1030
        %v1051 = vunpack.c.l.b16 %v1031
        %v1052 = vunpack.c.h.b16 %v1031
        %v1053 = vunpack.c.l.b16 %v1032
        %v1054 = vunpack.c.h.b16 %v1032
        %v1055 = vunpack.c.l.b16 %v1033
        %v1056 = vunpack.c.h.b16 %v1033
        %v1057 = vunpack.c.l.b16 %v1034
        %v1058 = vunpack.c.h.b16 %v1034
        %v1059 = vpack.c.b16 %v1043, %v1043
        %v1060 = vpack.c.b16 %v1044, %v1044
        %v1061 = vpack.c.b16 %v1045, %v1045
        %v1062 = vpack.c.b16 %v1046, %v1046
        %v1063 = vpack.c.b16 %v1047, %v1047
        %v1064 = vpack.c.b16 %v1048, %v1048
        %v1065 = vpack.c.b16 %v1049, %v1049
        %v1066 = vpack.c.b16 %v1050, %v1050
        %v1067 = vpack.c.b16 %v1051, %v1051
        %v1068 = vpack.c.b16 %v1052, %v1052
        %v1069 = vpack.c.b16 %v1053, %v1053
        %v1070 = vpack.c.b16 %v1054, %v1054
        %v1071 = vpack.c.b16 %v1055, %v1055
        %v1072 = vpack.c.b16 %v1056, %v1056
        %v1073 = vpack.c.b16 %v1057, %v1057
        %v1074 = vpack.c.b16 %v1058, %v1058
        %1091 = vst [vmem:[%s317] sm:$0xf] %v1059
        %1092 = vst [vmem:[%s317 + $0x4] sm:$0xf] %v1060
        %1093 = vst [vmem:[%s317 + $0x8] sm:$0xf] %v1061
        %1094 = vst [vmem:[%s317 + $0xc] sm:$0xf] %v1062
        %1095 = vst [vmem:[%s317 + $0x10] sm:$0xf] %v1063
        %1096 = vst [vmem:[%s317 + $0x14] sm:$0xf] %v1064
        %1097 = vst [vmem:[%s317 + $0x18] sm:$0xf] %v1065
        %1098 = vst [vmem:[%s317 + $0x1c] sm:$0xf] %v1066
        %1099 = vst [vmem:[%s317 + $0x20] sm:$0xf] %v1067
        %1100 = vst [vmem:[%s317 + $0x24] sm:$0xf] %v1068
        %1101 = vst [vmem:[%s317 + $0x28] sm:$0xf] %v1069
        %1102 = vst [vmem:[%s317 + $0x2c] sm:$0xf] %v1070
        %1103 = vst [vmem:[%s317 + $0x30] sm:$0xf] %v1071
        %1104 = vst [vmem:[%s317 + $0x34] sm:$0xf] %v1072
        %1105 = vst [vmem:[%s317 + $0x38] sm:$0xf] %v1073
        %1106 = vst [vmem:[%s317 + $0x3c] sm:$0xf] %v1074
        %v1107 = vpack.c.bf16 %v888, %v885
        %v1108 = vpack.c.bf16 %v896, %v893
        %v1109 = vpack.c.bf16 %v904, %v901
        %v1110 = vpack.c.bf16 %v912, %v909
        %v1111 = vpack.c.bf16 %v920, %v917
        %v1112 = vpack.c.bf16 %v928, %v925
        %v1113 = vpack.c.bf16 %v936, %v933
        %v1114 = vpack.c.bf16 %v944, %v941
        %v1123 = vunpack.c.l.b16 %v1107
        %v1124 = vunpack.c.h.b16 %v1107
        %v1125 = vunpack.c.l.b16 %v1108
        %v1126 = vunpack.c.h.b16 %v1108
        %v1127 = vunpack.c.l.b16 %v1109
        %v1128 = vunpack.c.h.b16 %v1109
        %v1129 = vunpack.c.l.b16 %v1110
        %v1130 = vunpack.c.h.b16 %v1110
        %v1131 = vunpack.c.l.b16 %v1111
        %v1132 = vunpack.c.h.b16 %v1111
        %v1133 = vunpack.c.l.b16 %v1112
        %v1134 = vunpack.c.h.b16 %v1112
        %v1135 = vunpack.c.l.b16 %v1113
        %v1136 = vunpack.c.h.b16 %v1113
        %v1137 = vunpack.c.l.b16 %v1114
        %v1138 = vunpack.c.h.b16 %v1114
        %v1139 = vpack.c.b16 %v1123, %v1123
        %v1140 = vpack.c.b16 %v1124, %v1124
        %v1141 = vpack.c.b16 %v1125, %v1125
        %v1142 = vpack.c.b16 %v1126, %v1126
        %v1143 = vpack.c.b16 %v1127, %v1127
        %v1144 = vpack.c.b16 %v1128, %v1128
        %v1145 = vpack.c.b16 %v1129, %v1129
        %v1146 = vpack.c.b16 %v1130, %v1130
        %v1147 = vpack.c.b16 %v1131, %v1131
        %v1148 = vpack.c.b16 %v1132, %v1132
        %v1149 = vpack.c.b16 %v1133, %v1133
        %v1150 = vpack.c.b16 %v1134, %v1134
        %v1151 = vpack.c.b16 %v1135, %v1135
        %v1152 = vpack.c.b16 %v1136, %v1136
        %v1153 = vpack.c.b16 %v1137, %v1137
        %v1154 = vpack.c.b16 %v1138, %v1138
        %1171 = vst [vmem:[%s324] sm:$0xf] %v1139
        %1172 = vst [vmem:[%s324 + $0x4] sm:$0xf] %v1140
        %1173 = vst [vmem:[%s324 + $0x8] sm:$0xf] %v1141
        %1174 = vst [vmem:[%s324 + $0xc] sm:$0xf] %v1142
        %1175 = vst [vmem:[%s324 + $0x10] sm:$0xf] %v1143
        %1176 = vst [vmem:[%s324 + $0x14] sm:$0xf] %v1144
        %1177 = vst [vmem:[%s324 + $0x18] sm:$0xf] %v1145
        %1178 = vst [vmem:[%s324 + $0x1c] sm:$0xf] %v1146
        %1179 = vst [vmem:[%s324 + $0x20] sm:$0xf] %v1147
        %1180 = vst [vmem:[%s324 + $0x24] sm:$0xf] %v1148
        %1181 = vst [vmem:[%s324 + $0x28] sm:$0xf] %v1149
        %1182 = vst [vmem:[%s324 + $0x2c] sm:$0xf] %v1150
        %1183 = vst [vmem:[%s324 + $0x30] sm:$0xf] %v1151
        %1184 = vst [vmem:[%s324 + $0x34] sm:$0xf] %v1152
        %1185 = vst [vmem:[%s324 + $0x38] sm:$0xf] %v1153
        %1186 = vst [vmem:[%s324 + $0x3c] sm:$0xf] %v1154
        %s1187 = sand.u32 %s141, 1
        %s1188 = scalar_lea.sflag [#allocation4], %s1187
        %s1189 = sand.u32 %s141, 1
        %s1190 = smul.addr %s1189, 64
        %s1191 = scalar_lea.vmem [#allocation7], %s1190
        %s1192 = sand.u32 %s28, 1
        %s1193 = scalar_lea.sflag [#allocation9], %s1192
        %s1194 = sand.u32 %s169, 1
        %s1195 = smul.addr %s1194, 64
        %s1196 = scalar_lea.vmem [#allocation8], %s1195
        %s1197 = sand.u32 %s28, 1
        %s1198 = scalar_lea.sflag [#allocation9], %s1197
        %s1199 = sand.u32 %s197, 1
        %s1200 = smul.addr %s1199, 64
        %s1201 = scalar_lea.vmem [#allocation10], %s1200
        // Predicated region
        $region45: #{tpu_custom_call.1} parent=35 // pred_check
          %p1202 = pneg %p151
        $region46: #{tpu_custom_call.1} parent=35 // pred_check_branch
          %1204 = sbr.rel (%p1202) target = $region48
        $region47: #{tpu_custom_call.1} parent=35 // pred_region
          %s1205 = smul.u32 16, %s33
          %s1207 = ssub.s32 1024, 1024
          %1208 = vsyncadd %s1188, %s1207
          %s1209 = smul.addr %s32, 32
          %s1210 = sadd.s32 %s1205, %s1209
          %s1211 = smul.addr %s1210, 64
          %s1212 = scalar_lea.hbm %s4, %s1211
          %s1213 = sshll.u32 %s1191, 4
          %s1214 = int_to_ptr.vmem [resolvable:$true] %s1213
          %1219 = dma.vmem_to_hbm [thread:$0]  %s1214, 1024, %s1212, %s1188, 64, 64, 4
        $region48: #{tpu_custom_call.1} parent=35 // pred_fallthru
          _
        // Predicated region
        $region49: #{tpu_custom_call.1} parent=35 // pred_check
          %p1220 = pneg %p179
        $region50: #{tpu_custom_call.1} parent=35 // pred_check_branch
          %1222 = sbr.rel (%p1220) target = $region52
        $region51: #{tpu_custom_call.1} parent=35 // pred_region
          %s1223 = smul.u32 16, %s33
          %s1225 = ssub.s32 1024, 1024
          %1226 = vsyncadd %s1193, %s1225
          %s1227 = smul.addr %s32, 32
          %s1228 = sadd.s32 %s1223, %s1227
          %s1229 = smul.addr %s1228, 64
          %s1230 = scalar_lea.hbm %s5, %s1229
          %s1231 = sshll.u32 %s1196, 4
          %s1232 = int_to_ptr.vmem [resolvable:$true] %s1231
          %1237 = dma.vmem_to_hbm [thread:$0]  %s1232, 1024, %s1230, %s1193, 64, 64, 4
        $region52: #{tpu_custom_call.1} parent=35 // pred_fallthru
          _
        // Predicated region
        $region53: #{tpu_custom_call.1} parent=35 // pred_check
          %p1238 = pneg %p207
        $region54: #{tpu_custom_call.1} parent=35 // pred_check_branch
          %1240 = sbr.rel (%p1238) target = $region56
        $region55: #{tpu_custom_call.1} parent=35 // pred_region
          %s1241 = smul.u32 16, %s33
          %s1243 = ssub.s32 1024, 1024
          %1244 = vsyncadd %s1198, %s1243
          %s1245 = smul.addr %s32, 32
          %s1246 = sadd.s32 %s1241, %s1245
          %s1247 = smul.addr %s1246, 64
          %s1248 = scalar_lea.hbm %s6, %s1247
          %s1249 = sshll.u32 %s1201, 4
          %s1250 = int_to_ptr.vmem [resolvable:$true] %s1249
          %1255 = dma.vmem_to_hbm [thread:$0]  %s1250, 1024, %s1248, %s1198, 64, 64, 4
        $region56: #{tpu_custom_call.1} parent=35 // pred_fallthru
          _
      $region36: #{tpu_custom_call.1} parent=5 // pred_fallthru
        _
      %p1256 = scmp.le.s32.totalorder 2, %s23
      // Predicated region
      $region57: #{tpu_custom_call.1} parent=5 // pred_check
        %p1257 = pneg %p1256
      $region58: #{tpu_custom_call.1} parent=5 // pred_check_branch
        %1259 = sbr.rel (%p1257) target = $region60
      $region59: #{tpu_custom_call.1} parent=5 // pred_region
        %s1260 = ssub.s32 %s23, 2
        // Predicated region
        $region61: #{tpu_custom_call.1} parent=59 // pred_check
          %p1261 = pneg %p157
        $region62: #{tpu_custom_call.1} parent=59 // pred_check_branch
          %1263 = sbr.rel (%p1261) target = $region64
        $region63: #{tpu_custom_call.1} parent=59 // pred_region
          %s1264 = sand.u32 %s142, 1
          %s1265 = scalar_lea.sflag [#allocation4], %s1264
          %s1266 = sand.u32 %s142, 1
          %s1267 = smul.addr %s1266, 64
          %s1268 = scalar_lea.vmem [#allocation7], %s1267
          %1269 = dma.done %s1265, 1024
        $region64: #{tpu_custom_call.1} parent=59 // pred_fallthru
          _
        // Predicated region
        $region65: #{tpu_custom_call.1} parent=59 // pred_check
          %p1270 = pneg %p185
        $region66: #{tpu_custom_call.1} parent=59 // pred_check_branch
          %1272 = sbr.rel (%p1270) target = $region68
        $region67: #{tpu_custom_call.1} parent=59 // pred_region
          %s1273 = sand.u32 %s29, 1
          %s1274 = scalar_lea.sflag [#allocation9], %s1273
          %s1275 = sand.u32 %s170, 1
          %s1276 = smul.addr %s1275, 64
          %s1277 = scalar_lea.vmem [#allocation8], %s1276
          %1278 = dma.done %s1274, 1024
        $region68: #{tpu_custom_call.1} parent=59 // pred_fallthru
          _
        // Predicated region
        $region69: #{tpu_custom_call.1} parent=59 // pred_check
          %p1279 = pneg %p213
        $region70: #{tpu_custom_call.1} parent=59 // pred_check_branch
          %1281 = sbr.rel (%p1279) target = $region72
        $region71: #{tpu_custom_call.1} parent=59 // pred_region
          %s1282 = sand.u32 %s29, 1
          %s1283 = scalar_lea.sflag [#allocation9], %s1282
          %s1284 = sand.u32 %s198, 1
          %s1285 = smul.addr %s1284, 64
          %s1286 = scalar_lea.vmem [#allocation10], %s1285
          %1287 = dma.done %s1283, 1024
        $region72: #{tpu_custom_call.1} parent=59 // pred_fallthru
          _
      $region60: #{tpu_custom_call.1} parent=5 // pred_fallthru
        _
    $region6: #{tpu_custom_call.1} parent=1 // loop_footer
      %s27 = sadd.s32 1, %s23
    $region7: #{tpu_custom_call.1} parent=1 // loop_footer_branch
      %22 = sbr.rel target = $region3
    $region8: #{tpu_custom_call.1} parent=1 // loop_exit
      _
    %1288 = vsyncpa [#allocation3], 1
    %s1289 = scalar_lea.sflag [#allocation3], 1
    %1290 = vsyncpa %s1289, 1
    %1291 = vsyncpa [#allocation6], 1
    %1292 = vsyncpa [#allocation4], 1
    %s1293 = scalar_lea.sflag [#allocation4], 1
    %1294 = vsyncpa %s1293, 1
    %1295 = vsyncpa [#allocation9], 1
    %s1296 = scalar_lea.sflag [#allocation9], 1
    %1297 = vsyncpa %s1296, 1

</llo_original>
